<compile_context>
chip_gen: v5e
topology: v5e:2x2
jax: 0.10.0
libtpu: 0.0.40
codegen_flags: <defaults>
</compile_context>

<pallas_src>
import functools

import jax
import jax.numpy as jnp
from jax.experimental import pallas as pl
from jax.experimental.pallas import tpu as pltpu


def _round_up(n, m):
    return ((n + m - 1) // m) * m


def _cdiv(a, b):
    return (a + b - 1) // b


def residual_mlp_kernel(x_ref, w1_ref, b1_ref, w2_ref, b2_ref, o_ref):
    x = x_ref[...]
    mm_dtype = w1_ref.dtype  # matmul operand dtype (bf16 fast path, or f32)

    # fc1 + ReLU: MXU matmul with f32 accumulation; bias/activation on the VPU in f32
    # (free filler under the MXU).
    h = jnp.dot(x.astype(mm_dtype), w1_ref[...], preferred_element_type=jnp.float32)
    h = jnp.maximum(h + b1_ref[...].astype(jnp.float32), 0.0)

    # fc2
    y = jnp.dot(h.astype(mm_dtype), w2_ref[...], preferred_element_type=jnp.float32)
    y = y + b2_ref[...].astype(jnp.float32)

    # Residual skip (same-step x block -> no RAW hazard with the output alias).
    o_ref[...] = (y + x.astype(jnp.float32)).astype(o_ref.dtype)


def residual_connection(x, w1, b1, w2, b2, *, block_b=512, prefer_bf16_matmul=True):
    """Fused relu(x @ w1 + b1) @ w2 + b2 + x.

    x: (B, F); w1: (F, F); b1: (1, F); w2: (F, F); b2: (1, F) -> (B, F).
    """
    B, F = x.shape
    assert w1.shape == (F, F) and w2.shape == (F, F)
    assert b1.shape == (1, F) and b2.shape == (1, F)

    # --- matmul operand dtype -------------------------------------------------------------
    mm_dtype = x.dtype
    if prefer_bf16_matmul and x.dtype == jnp.float32:
        # f32 matmuls run as multi-pass bf16 on the MXU; bf16 operands also halve weight
        # VMEM/HBM traffic.  Accumulation stays f32 via preferred_element_type.
        mm_dtype = jnp.bfloat16
    w1_mm = w1.astype(mm_dtype)
    w2_mm = w2.astype(mm_dtype)
    b1_f = b1.astype(jnp.float32)
    b2_f = b2.astype(jnp.float32)

    # --- batch tiling (feature dim is never padded: full-F blocks) -------------------------
    n_tiles = max(1, _cdiv(B, block_b))
    if n_tiles == 1 and B >= 16:
        n_tiles = 2  # >=2 grid steps so the "parallel" axis can use both v7x TensorCores
    TB = _round_up(_cdiv(B, n_tiles), 8)   # multiple of the 8-row sublane tile
    Bp = _round_up(B, TB)
    grid = (Bp // TB,)

    needs_pad = Bp != B
    x_in = jnp.pad(x, ((0, Bp - B), (0, 0))) if needs_pad else x

    itemsize_x = jnp.dtype(x.dtype).itemsize
    itemsize_w = jnp.dtype(mm_dtype).itemsize

    # VMEM footprint: single-buffered weights/biases + double-buffered x/out tiles + f32 temps.
    footprint = (
        2 * F * F * itemsize_w          # w1, w2 (Buffered(1))
        + 2 * F * 4                     # b1, b2 (f32)
        + 2 * 2 * TB * F * itemsize_x   # x and out tiles, double-buffered
        + 4 * TB * F * 4                # headroom for f32 intermediates (h, y, casts)
    )
    vmem_limit = int(min(max(2 * footprint, 32 << 20), 64 << 20))
    # TODO(synk): for F large enough that resident (F,F) weights blow ~64 MiB (v7x budget),
    # switch to a 2-D (batch x out-feature) grid with streamed weight tiles + accumulator
    # scratch (pl.when init/finalize) instead of this resident-weights path.

    flops = 2 * 2 * Bp * F * F  # two dense matmuls
    bytes_accessed = (
        2 * Bp * F * itemsize_x   # x read + out write
        + 2 * F * F * itemsize_w  # weights
        + 2 * F * 4               # biases
    )

    resident = functools.partial(pl.BlockSpec, pipeline_mode=pl.Buffered(1))

    out = pl.pallas_call(
        residual_mlp_kernel,
        out_shape=jax.ShapeDtypeStruct((Bp, F), x.dtype),
        grid=grid,
        in_specs=[
            pl.BlockSpec((TB, F), lambda i: (i, 0)),   # x: batch-tiled, double-buffered
            resident((F, F), lambda i: (0, 0)),        # w1: VMEM-resident, single buffer
            resident((1, F), lambda i: (0, 0)),        # b1
            resident((F, F), lambda i: (0, 0)),        # w2
            resident((1, F), lambda i: (0, 0)),        # b2
        ],
        out_specs=pl.BlockSpec((TB, F), lambda i: (i, 0)),
        # Alias only on the no-pad fast path (aliasing a throwaway padded temp saves nothing).
        input_output_aliases={} if needs_pad else {0: 0},
        compiler_params=pltpu.CompilerParams(
            dimension_semantics=("parallel",),
            vmem_limit_bytes=vmem_limit,
        ),
        cost_estimate=pl.CostEstimate(
            flops=flops, transcendentals=0, bytes_accessed=bytes_accessed
        ),
    )(x_in, w1_mm, b1_f, w2_mm, b2_f)

    return out[:B] if needs_pad else out


def _ref(x, w1, b1, w2, b2):
    h = jnp.maximum(x @ w1 + b1, 0.0)
    return h @ w2 + b2 + x


if __name__ == "__main__":
    B = 8          # batch rows
    FEAT = 32      # in_features == out_features (required by the residual add)

    key = jax.random.PRNGKey(0)
    kx, kw1, kb1, kw2, kb2 = jax.random.split(key, 5)

    # PyTorch-Linear-style uniform init in [-1/sqrt(fan_in), 1/sqrt(fan_in)].
    bound = 1.0 / (FEAT ** 0.5)
    x = jax.random.normal(kx, (B, FEAT), dtype=jnp.float32)
    w1 = jax.random.uniform(kw1, (FEAT, FEAT), jnp.float32, -bound, bound)
    b1 = jax.random.uniform(kb1, (1, FEAT), jnp.float32, -bound, bound)
    w2 = jax.random.uniform(kw2, (FEAT, FEAT), jnp.float32, -bound, bound)
    b2 = jax.random.uniform(kb2, (1, FEAT), jnp.float32, -bound, bound)

    expected = _ref(x, w1, b1, w2, b2)

    # Default fast path: aligned batch, bf16 MXU operands (f32 accumulation).
    fn_bf16 = jax.jit(functools.partial(residual_connection, prefer_bf16_matmul=True))
    out_bf16 = jax.block_until_ready(fn_bf16(x, w1, b1, w2, b2))
    assert out_bf16.shape == (B, FEAT)
    assert jnp.allclose(out_bf16, expected, atol=3e-2, rtol=3e-2)

    # Exact f32 path.
    fn_f32 = jax.jit(functools.partial(residual_connection, prefer_bf16_matmul=False))
    out_f32 = jax.block_until_ready(fn_f32(x, w1, b1, w2, b2))
    assert jnp.allclose(out_f32, expected, atol=1e-5, rtol=1e-5)

    # Unaligned batch: exercises the minimal batch-pad path (feature dim never padded).
    Bu = 11
    xu = jax.random.normal(kx, (Bu, FEAT), dtype=jnp.float32)
    out_u = jax.block_until_ready(fn_f32(xu, w1, b1, w2, b2))
    assert out_u.shape == (Bu, FEAT)
    assert jnp.allclose(out_u, _ref(xu, w1, b1, w2, b2), atol=1e-5, rtol=1e-5)

    print("KERNEL_OK")
</pallas_src>

<mosaic_0001>
module attributes {stable_mosaic.version = 11 : i64} {
  func.func @residual_mlp_kernel(%arg0: i32, %arg1: memref<8x32xf32, #tpu.memory_space<vmem>>, %arg2: memref<32x32xbf16, #tpu.memory_space<vmem>>, %arg3: memref<1x32xf32, #tpu.memory_space<vmem>>, %arg4: memref<32x32xbf16, #tpu.memory_space<vmem>>, %arg5: memref<1x32xf32, #tpu.memory_space<vmem>>, %arg6: memref<8x32xf32, #tpu.memory_space<vmem>>) attributes {dimension_semantics = [#tpu.dimension_semantics<parallel>], iteration_bounds = array<i64: 1>, scalar_prefetch = 0 : i64, scratch_operands = 0 : i64, tpu.core_type = #tpu.core_type<tc>, window_params = [{transform_indices = @transform_0, window_bounds = array<i64: 8, 32>}, {pipeline_mode = #tpu.pipeline_mode<synchronous>, transform_indices = @transform_1, window_bounds = array<i64: 32, 32>}, {pipeline_mode = #tpu.pipeline_mode<synchronous>, transform_indices = @transform_2, window_bounds = array<i64: 1, 32>}, {pipeline_mode = #tpu.pipeline_mode<synchronous>, transform_indices = @transform_3, window_bounds = array<i64: 32, 32>}, {pipeline_mode = #tpu.pipeline_mode<synchronous>, transform_indices = @transform_4, window_bounds = array<i64: 1, 32>}, {transform_indices = @transform_5, window_bounds = array<i64: 8, 32>}]} {
    %c0 = arith.constant 0 : index
    %c0_0 = arith.constant 0 : index
    %0 = vector.load %arg1[%c0, %c0_0] : memref<8x32xf32, #tpu.memory_space<vmem>>, vector<8x32xf32>
    %1 = arith.truncf %0 : vector<8x32xf32> to vector<8x32xbf16>
    %c0_1 = arith.constant 0 : index
    %c0_2 = arith.constant 0 : index
    %2 = vector.load %arg2[%c0_1, %c0_2] : memref<32x32xbf16, #tpu.memory_space<vmem>>, vector<32x32xbf16>
    %cst = arith.constant dense<0.000000e+00> : vector<8x32xf32>
    %3 = tpu.matmul %1, %2, %cst {dimension_numbers = #tpu.dot_dimension_numbers<[1], [0], [0], [1], [0, 0, 1, 1], [], []>} : vector<8x32xbf16>, vector<32x32xbf16>, vector<8x32xf32> -> vector<8x32xf32>
    %c0_3 = arith.constant 0 : index
    %c0_4 = arith.constant 0 : index
    %4 = vector.load %arg3[%c0_3, %c0_4] : memref<1x32xf32, #tpu.memory_space<vmem>>, vector<1x32xf32>
    %5 = vector.broadcast %4 : vector<1x32xf32> to vector<8x32xf32>
    %6 = arith.addf %3, %5 : vector<8x32xf32>
    %cst_5 = arith.constant 0.000000e+00 : f32
    %7 = vector.broadcast %cst_5 : f32 to vector<8x32xf32>
    %8 = arith.maximumf %6, %7 : vector<8x32xf32>
    %9 = arith.truncf %8 : vector<8x32xf32> to vector<8x32xbf16>
    %c0_6 = arith.constant 0 : index
    %c0_7 = arith.constant 0 : index
    %10 = vector.load %arg4[%c0_6, %c0_7] : memref<32x32xbf16, #tpu.memory_space<vmem>>, vector<32x32xbf16>
    %cst_8 = arith.constant dense<0.000000e+00> : vector<8x32xf32>
    %11 = tpu.matmul %9, %10, %cst_8 {dimension_numbers = #tpu.dot_dimension_numbers<[1], [0], [0], [1], [0, 0, 1, 1], [], []>} : vector<8x32xbf16>, vector<32x32xbf16>, vector<8x32xf32> -> vector<8x32xf32>
    %c0_9 = arith.constant 0 : index
    %c0_10 = arith.constant 0 : index
    %12 = vector.load %arg5[%c0_9, %c0_10] : memref<1x32xf32, #tpu.memory_space<vmem>>, vector<1x32xf32>
    %13 = vector.broadcast %12 : vector<1x32xf32> to vector<8x32xf32>
    %14 = arith.addf %11, %13 : vector<8x32xf32>
    %15 = arith.addf %14, %0 : vector<8x32xf32>
    %c0_11 = arith.constant 0 : index
    %c0_12 = arith.constant 0 : index
    %16 = vector.load %arg6[%c0_11, %c0_12] : memref<8x32xf32, #tpu.memory_space<vmem>>, vector<8x32xf32>
    tpu.vector_store %arg6[%c0_11, %c0_12], %15 {strides = array<i32>} : memref<8x32xf32, #tpu.memory_space<vmem>>, vector<8x32xf32>,
    return
  }
  func.func @transform_0(%arg0: i32) -> (i32, i32) {
    %c0_i32 = arith.constant 0 : i32
    %c0_i32_0 = arith.constant 0 : i32
    return %arg0, %c0_i32 : i32, i32
  }
  func.func @transform_1(%arg0: i32) -> (i32, i32) {
    %c0_i32 = arith.constant 0 : i32
    %c0_i32_0 = arith.constant 0 : i32
    %c0_i32_1 = arith.constant 0 : i32
    return %c0_i32, %c0_i32_0 : i32, i32
  }
  func.func @transform_2(%arg0: i32) -> (i32, i32) {
    %c0_i32 = arith.constant 0 : i32
    %c0_i32_0 = arith.constant 0 : i32
    %c0_i32_1 = arith.constant 0 : i32
    return %c0_i32, %c0_i32_0 : i32, i32
  }
  func.func @transform_3(%arg0: i32) -> (i32, i32) {
    %c0_i32 = arith.constant 0 : i32
    %c0_i32_0 = arith.constant 0 : i32
    %c0_i32_1 = arith.constant 0 : i32
    return %c0_i32, %c0_i32_0 : i32, i32
  }
  func.func @transform_4(%arg0: i32) -> (i32, i32) {
    %c0_i32 = arith.constant 0 : i32
    %c0_i32_0 = arith.constant 0 : i32
    %c0_i32_1 = arith.constant 0 : i32
    return %c0_i32, %c0_i32_0 : i32, i32
  }
  func.func @transform_5(%arg0: i32) -> (i32, i32) {
    %c0_i32 = arith.constant 0 : i32
    %c0_i32_0 = arith.constant 0 : i32
    return %arg0, %c0_i32 : i32, i32
  }
}

</mosaic_0001>

<llo_original>
// kernel: residual_connection.1
$region0: #{residual_connection.1}
  #allocation0 [shape = 'u32[]', space=smem, size = 0x4, offset = 0x4, fixed_abs, tag = 'smem constant byte address 0x4 - core index']
  #allocation1 [shape = 'u32[72,128]{1,0:T(1,128)}', space=vmem, size = 0x9000, scoped, tag = 'internal scratch']
  %s0 = inlined_call_operand.hbm [shape: f32[8,32], index: 0, kind: input, shape index: {}, may-alias: {0,5}]
  %s1 = inlined_call_operand.vmem [shape: bf16[32,32], index: 1, kind: input, shape index: {}]
  %s2 = inlined_call_operand.vmem [shape: f32[1,32], index: 2, kind: input, shape index: {}]
  %s3 = inlined_call_operand.vmem [shape: bf16[32,32], index: 3, kind: input, shape index: {}]
  %s4 = inlined_call_operand.vmem [shape: f32[1,32], index: 4, kind: input, shape index: {}]
  %s5 = inlined_call_operand.hbm [shape: f32[8,32], index: 5, kind: output, shape index: {}, may-alias: {0,5}]
  %s6 = sld [smem:[#allocation0]]
  $region34: #{residual_connection.1} parent=0
    _
  %s8 = ssub.s32 1, %s6
  %s9 = scalar_select 0, %s8, %s6
  $region1: #{residual_connection.1} parent=0
    #allocation2 [shape = 'u8[4096]{0}', space=vmem, size = 0x1000, scoped, tag = 'input window, operand 0, single buffered']
    #allocation3 [shape = 's32[1]{0}', space=sflag, size = 0x4, scoped, tag = 'scoped memory for residual_connection.1']
    #allocation4 [shape = 's32[1]{0}', space=sflag, size = 0x4, scoped, tag = 'scoped memory for residual_connection.1']
    #allocation5 [shape = 'u8[4096]{0}', space=vmem, size = 0x1000, scoped, tag = 'output window, operand 0, single buffered']
    %10 = vsyncpa [#allocation3], 0
    %11 = vsyncpa [#allocation4], 0
    // Predicated region
    $region2: #{residual_connection.1} parent=1 // pred_check
      _
    $region3: #{residual_connection.1} parent=1 // pred_check_branch
      %13 = sbr.rel (0) target = $region5
    $region4: #{residual_connection.1} parent=1 // pred_region
      %15 = vsyncadd [#allocation3], 0
      %s17 = sshll.u32 %s0, 4
      %s18 = int_to_ptr.hbm [resolvable:$true] %s17
      %s19 = sshll.u32 [#allocation2], 4
      %s20 = int_to_ptr.vmem [resolvable:$true] %s19
      %22 = dma.hbm_to_vmem [thread:$0]  %s18, 128, %s20, [#allocation3]
    $region5: #{residual_connection.1} parent=1 // pred_fallthru
      _
    // Predicated region
    $region6: #{residual_connection.1} parent=1 // pred_check
      _
    $region7: #{residual_connection.1} parent=1 // pred_check_branch
      %24 = sbr.rel (0) target = $region9
    $region8: #{residual_connection.1} parent=1 // pred_region
      _
    $region9: #{residual_connection.1} parent=1 // pred_fallthru
      _
    // Predicated region
    $region10: #{residual_connection.1} parent=1 // pred_check
      _
    $region11: #{residual_connection.1} parent=1 // pred_check_branch
      %26 = sbr.rel (0) target = $region13
    $region12: #{residual_connection.1} parent=1 // pred_region
      _
    $region13: #{residual_connection.1} parent=1 // pred_fallthru
      _
    // Predicated region
    $region14: #{residual_connection.1} parent=1 // pred_check
      _
    $region15: #{residual_connection.1} parent=1 // pred_check_branch
      %28 = sbr.rel (0) target = $region17
    $region16: #{residual_connection.1} parent=1 // pred_region
      _
    $region17: #{residual_connection.1} parent=1 // pred_fallthru
      _
    // Predicated region
    $region18: #{residual_connection.1} parent=1 // pred_check
      _
    $region19: #{residual_connection.1} parent=1 // pred_check_branch
      %30 = sbr.rel (0) target = $region21
    $region20: #{residual_connection.1} parent=1 // pred_region
      _
    $region21: #{residual_connection.1} parent=1 // pred_fallthru
      _
    // Predicated region
    $region22: #{residual_connection.1} parent=1 // pred_check
      _
    $region23: #{residual_connection.1} parent=1 // pred_check_branch
      %32 = sbr.rel (0) target = $region25
    $region24: #{residual_connection.1} parent=1 // pred_region
      %34 = dma.done [#allocation3], 128
    $region25: #{residual_connection.1} parent=1 // pred_fallthru
      _
    %v36 = vld [vmem:[#allocation2] sm:$0xff]
    %v37 = vpack.c.bf16 %v36, %v36
    %v38 = vld [vmem:[%s1] sm:$0xf]
    %v39 = vld [vmem:[%s1 + $0x4] sm:$0xf]
    %v40 = vld [vmem:[%s1 + $0x8] sm:$0xf]
    %v41 = vld [vmem:[%s1 + $0xc] sm:$0xf]
    %v42 = vld [vmem:[%s2] sm:$0x1]
    %v44 = vperm.slane %v42, 0
    %v50 = vunpack.c.l.b16 %v38
    %v51 = vunpack.c.l.b16 %v39
    %v52 = vunpack.c.l.b16 %v40
    %v53 = vunpack.c.l.b16 %v41
    %v54 = vpack.c.b16 %v51, %v50
    %v55 = vpack.c.b16 %v53, %v52
    %vm58 = vcmask 261120
    %v60 = vsel %vm58, %v37, 0
    %62 = vmatpush.bf16.msra.mxu0 0
    %63 = vmatpush.bf16.msra.mxu0 0
    %64 = vmatpush.bf16.msra.mxu0 0
    %65 = vmatpush.bf16.msra.mxu0 0
    %66 = vmatpush.bf16.msra.mxu0 0
    %67 = vmatpush.bf16.msra.mxu0 0
    %68 = vmatpush.bf16.msra.mxu0 %v55
    %69 = vmatpush.bf16.msra.mxu0 %v54
    %70 = vmatmul.bf16.gmra.mxu0 %v60
    %v71 = vpop.f32.mrf.mxu0
    %v72 = vadd.f32 %v44, %v71
    %v73 = vpop.f32.mrf.mxu0
    %74 = vdwg.mxu0
    %v75 = vmax.f32 %v72, 0.0
    %v76 = vpack.c.bf16 %v75, %v75
    %v77 = vld [vmem:[%s3] sm:$0xf]
    %v78 = vld [vmem:[%s3 + $0x4] sm:$0xf]
    %v79 = vld [vmem:[%s3 + $0x8] sm:$0xf]
    %v80 = vld [vmem:[%s3 + $0xc] sm:$0xf]
    %v81 = vld [vmem:[%s4] sm:$0x1]
    %v83 = vperm.slane %v81, 0
    %v89 = vunpack.c.l.b16 %v77
    %v90 = vunpack.c.l.b16 %v78
    %v91 = vunpack.c.l.b16 %v79
    %v92 = vunpack.c.l.b16 %v80
    %v93 = vpack.c.b16 %v90, %v89
    %v94 = vpack.c.b16 %v92, %v91
    %v98 = vsel %vm58, %v76, 0
    %100 = vmatpush.bf16.msra.mxu0 0
    %101 = vmatpush.bf16.msra.mxu0 0
    %102 = vmatpush.bf16.msra.mxu0 0
    %103 = vmatpush.bf16.msra.mxu0 0
    %104 = vmatpush.bf16.msra.mxu0 0
    %105 = vmatpush.bf16.msra.mxu0 0
    %106 = vmatpush.bf16.msra.mxu0 %v94
    %107 = vmatpush.bf16.msra.mxu0 %v93
    %108 = vmatmul.bf16.gmra.mxu0 %v98
    %v109 = vpop.f32.mrf.mxu0
    %v110 = vadd.f32 %v83, %v109
    %v111 = vpop.f32.mrf.mxu0
    %112 = vdwg.mxu0
    %v113 = vadd.f32 %v110, %v36
    %114 = vst.msk [vmem:[#allocation5] sm:$0xff] %vm58, %v113
    // Predicated region
    $region26: #{residual_connection.1} parent=1 // pred_check
      _
    $region27: #{residual_connection.1} parent=1 // pred_check_branch
      %116 = sbr.rel (0) target = $region29
    $region28: #{residual_connection.1} parent=1 // pred_region
      %118 = vsyncadd [#allocation4], 0
      %s120 = sshll.u32 [#allocation5], 4
      %s121 = int_to_ptr.vmem [resolvable:$true] %s120
      %s122 = sshll.u32 %s5, 4
      %s123 = int_to_ptr.hbm [resolvable:$true] %s122
      %125 = dma.vmem_to_hbm [thread:$0]  %s121, 128, %s123, [#allocation4]
    $region29: #{residual_connection.1} parent=1 // pred_fallthru
      _
    // Predicated region
    $region30: #{residual_connection.1} parent=1 // pred_check
      _
    $region31: #{residual_connection.1} parent=1 // pred_check_branch
      %127 = sbr.rel (0) target = $region33
    $region32: #{residual_connection.1} parent=1 // pred_region
      %129 = dma.done [#allocation4], 128
    $region33: #{residual_connection.1} parent=1 // pred_fallthru
      _
    %130 = vsyncpa [#allocation3], 1
    %131 = vsyncpa [#allocation4], 1

</llo_original>
